<compile_context>
chip_gen: v7x
topology: tpu7x:2x2x1
jax: 0.10.0
libtpu: 0.0.40
codegen_flags: <defaults>
</compile_context>

<pallas_src>
import jax
import jax.numpy as jnp
from jax import lax
from jax.experimental import pallas as pl
from jax.experimental.pallas import tpu as pltpu  # noqa: F401  (TPU backend)

# ---- problem sizes (small, consistent with the module) ----
B = 2          # batch
N_Q = 16       # query sequence length
N_KV = 8       # key/value sequence length
C = 32         # model dim
NUM_HEADS = 8
HEAD_DIM = C // NUM_HEADS
SCALE = HEAD_DIM ** (-0.5)

BQ = B * N_Q            # 32  flattened query rows
BK = B * N_KV           # 16  flattened key/value rows
R = BQ * NUM_HEADS      # 256 score columns; column r <-> (b, n, h)


def mha_kernel(xq_ref, xk_ref, xv_ref, w_ref, b_ref,
               expand_ref, hmask_ref, pool_ref, bias_ref, o_ref):
    f32 = jnp.float32
    bf16 = jnp.bfloat16

    # ---- Q/K/V projections: bf16 MXU operands, f32 accumulate, f32 bias adds.
    #      (attention SCALE already folded into w[0]/b[0] by prepare_kernel_params)
    q = jnp.dot(xq_ref[...], w_ref[0], preferred_element_type=f32) + b_ref[0]   # (BQ, C)
    k = jnp.dot(xk_ref[...], w_ref[1], preferred_element_type=f32) + b_ref[1]   # (BK, C)
    v = jnp.dot(xv_ref[...], w_ref[2], preferred_element_type=f32) + b_ref[2]   # (BK, C)

    # ---- per-(batch, query, head) queries: replicate each query row per head
    #      (one-hot matmul) and keep only that head's channels (f32 mask mul).
    #      Constants come in as operands -> no in-kernel iota / compare work.
    q_rep = jnp.dot(expand_ref[...], q.astype(bf16), preferred_element_type=f32)  # (R, C)
    q_rep = q_rep * hmask_ref[...]                                                 # (R, C)

    # ---- scores, TRANSPOSED: s_T[m, r] = sum_c k[m,c] * q_rep[r,c]
    #      -> lane axis is the fully dense R = 256, softmax axis is 16 sublanes.
    s_t = lax.dot_general(k.astype(bf16), q_rep.astype(bf16),
                          (((1,), (1,)), ((), ())),
                          preferred_element_type=f32)                              # (BK, R)
    s_t = s_t + bias_ref[...]          # additive 0 / -1e30 cross-batch mask

    # ---- softmax over keys (axis 0, sublane reduce); EUP reciprocal divide.
    s_t = s_t - jnp.max(s_t, axis=0, keepdims=True)
    p_t = jnp.exp(s_t)
    p_t = p_t * pl.reciprocal(jnp.sum(p_t, axis=0, keepdims=True), approx=True)    # (BK, R)

    # ---- attention output: contract the key axis (dim 0 of both operands),
    #      mask to each row's head channels, pool heads back per query row.
    pv = lax.dot_general(p_t.astype(bf16), v.astype(bf16),
                         (((0,), (0,)), ((), ())),
                         preferred_element_type=f32)                               # (R, C)
    pv = pv * hmask_ref[...]
    att = jnp.dot(pool_ref[...], pv.astype(bf16), preferred_element_type=f32)      # (BQ, C)

    # ---- output projection (attn_drop / proj_drop are identity at p = 0.0).
    o_ref[...] = (jnp.dot(att.astype(bf16), w_ref[3], preferred_element_type=f32)
                  + b_ref[3]).astype(o_ref.dtype)


def mha_pallas(x_q, x_k, x_v, kernel_params):
    """Grid-less single-call wrapper: flatten batch onto rows, run once."""
    w_pack, b_pack, expand, head_mask, pool, bias_t = kernel_params
    xq2 = x_q.reshape(BQ, C).astype(jnp.bfloat16)
    xk2 = x_k.reshape(BK, C).astype(jnp.bfloat16)
    xv2 = x_v.reshape(BK, C).astype(jnp.bfloat16)
    out2 = pl.pallas_call(
        mha_kernel,
        out_shape=jax.ShapeDtypeStruct((BQ, C), jnp.float32),
    )(xq2, xk2, xv2, w_pack, b_pack, expand, head_mask, pool, bias_t)
    return out2.reshape(B, N_Q, C)


def mha_reference(x_q, x_k, x_v, params):
    """Pure-JAX reference mirroring the PyTorch module semantics (f32)."""
    wq, bq, wk, bk, wv, bv, wp, bp = params
    q = x_q @ wq + bq
    k = x_k @ wk + bk
    v = x_v @ wv + bv
    _q = q.reshape(B, N_Q, NUM_HEADS, HEAD_DIM)
    _k = k.reshape(B, N_KV, NUM_HEADS, HEAD_DIM)
    _v = v.reshape(B, N_KV, NUM_HEADS, HEAD_DIM)
    qk = jnp.einsum('bnhd,bmhd->bhnm', _q, _k)
    att = jax.nn.softmax(qk * SCALE, axis=3)
    att_out = jnp.einsum('bhnm,bmhd->bnhd', att, _v)
    x = att_out.reshape(B, N_Q, C)
    return x @ wp + bp


def make_params(key):
    """Deterministic parameter init (uniform, nn.Linear-like scale).
    Weights are stored pre-transposed as (C_in, C_out) so y = x @ W + b."""
    keys = jax.random.split(key, 8)
    bound = 1.0 / (C ** 0.5)

    def u(k, shape):
        return jax.random.uniform(k, shape, jnp.float32, -bound, bound)

    wq, wk, wv, wp = (u(keys[i], (C, C)) for i in range(4))
    bq, bk, bv, bp = (u(keys[4 + i], (1, C)) for i in range(4))
    return (wq, bq, wk, bk, wv, bv, wp, bp)


def prepare_kernel_params(params):
    """One-time transform: fold the attention scale into the Q projection,
    pack the 8 linear params into 2 operands, and precompute the selector /
    mask constants that the kernel consumes (instead of rebuilding them
    in-kernel with iota/compare chains)."""
    wq, bq, wk, bk, wv, bv, wp, bp = params

    w_pack = jnp.stack([wq * SCALE, wk, wv, wp]).astype(jnp.bfloat16)   # (4, C, C)
    b_pack = jnp.stack([bq * SCALE, bk, bv, bp]).astype(jnp.float32)    # (4, 1, C)

    r = jnp.arange(R)
    # expand: replicate flattened query row j = r // NUM_HEADS onto score row r
    expand = (jnp.arange(BQ)[None, :] == (r // NUM_HEADS)[:, None]
              ).astype(jnp.bfloat16)                                     # (R, BQ)
    # head_mask: score row r keeps only channels of its head h = r % NUM_HEADS
    head_mask = ((jnp.arange(C)[None, :] // HEAD_DIM) == (r % NUM_HEADS)[:, None]
                 ).astype(jnp.float32)                                   # (R, C)
    # pool: sum the NUM_HEADS score rows of each query back into one output row
    pool = ((jnp.arange(R)[None, :] // NUM_HEADS) == jnp.arange(BQ)[:, None]
            ).astype(jnp.bfloat16)                                       # (BQ, R)
    # additive cross-batch bias on the TRANSPOSED (BK, R) score layout
    same_batch = ((r // (N_Q * NUM_HEADS))[None, :]
                  == (jnp.arange(BK) // N_KV)[:, None])                  # (BK, R)
    bias_t = jnp.where(same_batch, 0.0, -1e30).astype(jnp.float32)       # (BK, R)

    return (w_pack, b_pack, expand, head_mask, pool, bias_t)


if __name__ == "__main__":
    key = jax.random.PRNGKey(0)
    k_xq, k_xk, k_xv, k_p = jax.random.split(key, 4)

    x_q = jax.random.normal(k_xq, (B, N_Q, C), jnp.float32)
    x_k = jax.random.normal(k_xk, (B, N_KV, C), jnp.float32)
    x_v = jax.random.normal(k_xv, (B, N_KV, C), jnp.float32)

    params = make_params(k_p)
    kernel_params = prepare_kernel_params(params)   # one-time packing / constants

    out = mha_pallas(x_q, x_k, x_v, kernel_params)
    out = jax.block_until_ready(out)

    ref = mha_reference(x_q, x_k, x_v, params)
    assert out.shape == (B, N_Q, C)
    # tolerance budget covers bf16 MXU operands (f32 accumulate) plus the EUP
    # approximate reciprocal in the softmax; a wrong kernel errs at O(1e-1+).
    assert jnp.allclose(out, ref, atol=2e-2, rtol=2e-2), \
        f"max abs err = {jnp.max(jnp.abs(out - ref))}"

    print("KERNEL_OK")
</pallas_src>

<mosaic_0001>
module attributes {stable_mosaic.version = 11 : i64} {
  func.func @mha_kernel(%arg0: memref<32x32xbf16, #tpu.memory_space<vmem>>, %arg1: memref<16x32xbf16, #tpu.memory_space<vmem>>, %arg2: memref<16x32xbf16, #tpu.memory_space<vmem>>, %arg3: memref<4x32x32xbf16, #tpu.memory_space<vmem>>, %arg4: memref<4x1x32xf32, #tpu.memory_space<vmem>>, %arg5: memref<256x32xbf16, #tpu.memory_space<vmem>>, %arg6: memref<256x32xf32, #tpu.memory_space<vmem>>, %arg7: memref<32x256xbf16, #tpu.memory_space<vmem>>, %arg8: memref<16x256xf32, #tpu.memory_space<vmem>>, %arg9: memref<32x32xf32, #tpu.memory_space<vmem>>) attributes {dimension_semantics = [], scalar_prefetch = 0 : i64, scratch_operands = 0 : i64, tpu.core_type = #tpu.core_type<tc>} {
    %c0 = arith.constant 0 : index
    %c0_0 = arith.constant 0 : index
    %0 = vector.load %arg0[%c0, %c0_0] : memref<32x32xbf16, #tpu.memory_space<vmem>>, vector<32x32xbf16>
    %c0_1 = arith.constant 0 : index
    %c0_2 = arith.constant 0 : index
    %c0_3 = arith.constant 0 : index
    %1 = vector.load %arg3[%c0_1, %c0_2, %c0_3] : memref<4x32x32xbf16, #tpu.memory_space<vmem>>, vector<1x32x32xbf16>
    %2 = vector.shape_cast %1 : vector<1x32x32xbf16> to vector<32x32xbf16>
    %cst = arith.constant dense<0.000000e+00> : vector<32x32xf32>
    %3 = tpu.matmul %0, %2, %cst {dimension_numbers = #tpu.dot_dimension_numbers<[1], [0], [0], [1], [0, 0, 1, 1], [], []>} : vector<32x32xbf16>, vector<32x32xbf16>, vector<32x32xf32> -> vector<32x32xf32>
    %c0_4 = arith.constant 0 : index
    %c0_5 = arith.constant 0 : index
    %c0_6 = arith.constant 0 : index
    %4 = vector.load %arg4[%c0_4, %c0_5, %c0_6] : memref<4x1x32xf32, #tpu.memory_space<vmem>>, vector<1x1x32xf32>
    %5 = vector.shape_cast %4 : vector<1x1x32xf32> to vector<1x32xf32>
    %6 = vector.broadcast %5 : vector<1x32xf32> to vector<32x32xf32>
    %7 = arith.addf %3, %6 : vector<32x32xf32>
    %c0_7 = arith.constant 0 : index
    %c0_8 = arith.constant 0 : index
    %8 = vector.load %arg1[%c0_7, %c0_8] : memref<16x32xbf16, #tpu.memory_space<vmem>>, vector<16x32xbf16>
    %c1 = arith.constant 1 : index
    %c0_9 = arith.constant 0 : index
    %c0_10 = arith.constant 0 : index
    %9 = vector.load %arg3[%c1, %c0_9, %c0_10] : memref<4x32x32xbf16, #tpu.memory_space<vmem>>, vector<1x32x32xbf16>
    %10 = vector.shape_cast %9 : vector<1x32x32xbf16> to vector<32x32xbf16>
    %cst_11 = arith.constant dense<0.000000e+00> : vector<16x32xf32>
    %11 = tpu.matmul %8, %10, %cst_11 {dimension_numbers = #tpu.dot_dimension_numbers<[1], [0], [0], [1], [0, 0, 1, 1], [], []>} : vector<16x32xbf16>, vector<32x32xbf16>, vector<16x32xf32> -> vector<16x32xf32>
    %c1_12 = arith.constant 1 : index
    %c0_13 = arith.constant 0 : index
    %c0_14 = arith.constant 0 : index
    %12 = vector.load %arg4[%c1_12, %c0_13, %c0_14] : memref<4x1x32xf32, #tpu.memory_space<vmem>>, vector<1x1x32xf32>
    %13 = vector.shape_cast %12 : vector<1x1x32xf32> to vector<1x32xf32>
    %14 = vector.broadcast %13 : vector<1x32xf32> to vector<16x32xf32>
    %15 = arith.addf %11, %14 : vector<16x32xf32>
    %c0_15 = arith.constant 0 : index
    %c0_16 = arith.constant 0 : index
    %16 = vector.load %arg2[%c0_15, %c0_16] : memref<16x32xbf16, #tpu.memory_space<vmem>>, vector<16x32xbf16>
    %c2 = arith.constant 2 : index
    %c0_17 = arith.constant 0 : index
    %c0_18 = arith.constant 0 : index
    %17 = vector.load %arg3[%c2, %c0_17, %c0_18] : memref<4x32x32xbf16, #tpu.memory_space<vmem>>, vector<1x32x32xbf16>
    %18 = vector.shape_cast %17 : vector<1x32x32xbf16> to vector<32x32xbf16>
    %cst_19 = arith.constant dense<0.000000e+00> : vector<16x32xf32>
    %19 = tpu.matmul %16, %18, %cst_19 {dimension_numbers = #tpu.dot_dimension_numbers<[1], [0], [0], [1], [0, 0, 1, 1], [], []>} : vector<16x32xbf16>, vector<32x32xbf16>, vector<16x32xf32> -> vector<16x32xf32>
    %c2_20 = arith.constant 2 : index
    %c0_21 = arith.constant 0 : index
    %c0_22 = arith.constant 0 : index
    %20 = vector.load %arg4[%c2_20, %c0_21, %c0_22] : memref<4x1x32xf32, #tpu.memory_space<vmem>>, vector<1x1x32xf32>
    %21 = vector.shape_cast %20 : vector<1x1x32xf32> to vector<1x32xf32>
    %22 = vector.broadcast %21 : vector<1x32xf32> to vector<16x32xf32>
    %23 = arith.addf %19, %22 : vector<16x32xf32>
    %c0_23 = arith.constant 0 : index
    %c0_24 = arith.constant 0 : index
    %24 = vector.load %arg5[%c0_23, %c0_24] : memref<256x32xbf16, #tpu.memory_space<vmem>>, vector<256x32xbf16>
    %25 = arith.truncf %7 : vector<32x32xf32> to vector<32x32xbf16>
    %cst_25 = arith.constant dense<0.000000e+00> : vector<256x32xf32>
    %26 = tpu.matmul %24, %25, %cst_25 {dimension_numbers = #tpu.dot_dimension_numbers<[1], [0], [0], [1], [0, 0, 1, 1], [], []>} : vector<256x32xbf16>, vector<32x32xbf16>, vector<256x32xf32> -> vector<256x32xf32>
    %c0_26 = arith.constant 0 : index
    %c0_27 = arith.constant 0 : index
    %27 = vector.load %arg6[%c0_26, %c0_27] : memref<256x32xf32, #tpu.memory_space<vmem>>, vector<256x32xf32>
    %28 = arith.mulf %26, %27 : vector<256x32xf32>
    %29 = arith.truncf %15 : vector<16x32xf32> to vector<16x32xbf16>
    %30 = arith.truncf %28 : vector<256x32xf32> to vector<256x32xbf16>
    %cst_28 = arith.constant dense<0.000000e+00> : vector<16x256xf32>
    %31 = tpu.matmul %29, %30, %cst_28 {dimension_numbers = #tpu.dot_dimension_numbers<[1], [1], [0], [0], [0, 0, 1, 0], [], []>} : vector<16x32xbf16>, vector<256x32xbf16>, vector<16x256xf32> -> vector<16x256xf32>
    %c0_29 = arith.constant 0 : index
    %c0_30 = arith.constant 0 : index
    %32 = vector.load %arg8[%c0_29, %c0_30] : memref<16x256xf32, #tpu.memory_space<vmem>>, vector<16x256xf32>
    %33 = arith.addf %31, %32 : vector<16x256xf32>
    %cst_31 = arith.constant dense<0xFF800000> : vector<256xf32>
    %34 = vector.multi_reduction <maximumf>, %33, %cst_31 [0] : vector<16x256xf32> to vector<256xf32>
    %35 = vector.shape_cast %34 : vector<256xf32> to vector<1x256xf32>
    %36 = vector.broadcast %35 : vector<1x256xf32> to vector<16x256xf32>
    %37 = arith.subf %33, %36 : vector<16x256xf32>
    %38 = math.exp %37 : vector<16x256xf32>
    %cst_32 = arith.constant dense<0.000000e+00> : vector<256xf32>
    %39 = vector.multi_reduction <add>, %38, %cst_32 [0] : vector<16x256xf32> to vector<256xf32>
    %40 = vector.shape_cast %39 : vector<256xf32> to vector<1x256xf32>
    %41 = tpu.reciprocal %40 {approx = true} : vector<1x256xf32> -> vector<1x256xf32>
    %42 = vector.broadcast %41 : vector<1x256xf32> to vector<16x256xf32>
    %43 = arith.mulf %38, %42 : vector<16x256xf32>
    %44 = arith.truncf %43 : vector<16x256xf32> to vector<16x256xbf16>
    %45 = arith.truncf %23 : vector<16x32xf32> to vector<16x32xbf16>
    %cst_33 = arith.constant dense<0.000000e+00> : vector<256x32xf32>
    %46 = tpu.matmul %44, %45, %cst_33 {dimension_numbers = #tpu.dot_dimension_numbers<[0], [0], [1], [1], [0, 1, 1, 1], [], []>} : vector<16x256xbf16>, vector<16x32xbf16>, vector<256x32xf32> -> vector<256x32xf32>
    %c0_34 = arith.constant 0 : index
    %c0_35 = arith.constant 0 : index
    %47 = vector.load %arg6[%c0_34, %c0_35] : memref<256x32xf32, #tpu.memory_space<vmem>>, vector<256x32xf32>
    %48 = arith.mulf %46, %47 : vector<256x32xf32>
    %c0_36 = arith.constant 0 : index
    %c0_37 = arith.constant 0 : index
    %49 = vector.load %arg7[%c0_36, %c0_37] : memref<32x256xbf16, #tpu.memory_space<vmem>>, vector<32x256xbf16>
    %50 = arith.truncf %48 : vector<256x32xf32> to vector<256x32xbf16>
    %cst_38 = arith.constant dense<0.000000e+00> : vector<32x32xf32>
    %51 = tpu.matmul %49, %50, %cst_38 {dimension_numbers = #tpu.dot_dimension_numbers<[1], [0], [0], [1], [0, 0, 1, 1], [], []>} : vector<32x256xbf16>, vector<256x32xbf16>, vector<32x32xf32> -> vector<32x32xf32>
    %52 = arith.truncf %51 : vector<32x32xf32> to vector<32x32xbf16>
    %c3 = arith.constant 3 : index
    %c0_39 = arith.constant 0 : index
    %c0_40 = arith.constant 0 : index
    %53 = vector.load %arg3[%c3, %c0_39, %c0_40] : memref<4x32x32xbf16, #tpu.memory_space<vmem>>, vector<1x32x32xbf16>
    %54 = vector.shape_cast %53 : vector<1x32x32xbf16> to vector<32x32xbf16>
    %cst_41 = arith.constant dense<0.000000e+00> : vector<32x32xf32>
    %55 = tpu.matmul %52, %54, %cst_41 {dimension_numbers = #tpu.dot_dimension_numbers<[1], [0], [0], [1], [0, 0, 1, 1], [], []>} : vector<32x32xbf16>, vector<32x32xbf16>, vector<32x32xf32> -> vector<32x32xf32>
    %c3_42 = arith.constant 3 : index
    %c0_43 = arith.constant 0 : index
    %c0_44 = arith.constant 0 : index
    %56 = vector.load %arg4[%c3_42, %c0_43, %c0_44] : memref<4x1x32xf32, #tpu.memory_space<vmem>>, vector<1x1x32xf32>
    %57 = vector.shape_cast %56 : vector<1x1x32xf32> to vector<1x32xf32>
    %58 = vector.broadcast %57 : vector<1x32xf32> to vector<32x32xf32>
    %59 = arith.addf %55, %58 : vector<32x32xf32>
    %c0_45 = arith.constant 0 : index
    %c0_46 = arith.constant 0 : index
    %60 = vector.load %arg9[%c0_45, %c0_46] : memref<32x32xf32, #tpu.memory_space<vmem>>, vector<32x32xf32>
    tpu.vector_store %arg9[%c0_45, %c0_46], %59 {strides = array<i32>} : memref<32x32xf32, #tpu.memory_space<vmem>>, vector<32x32xf32>,
    return
  }
}

</mosaic_0001>

<llo_original>
// kernel: tpu_custom_call.1
$region0: #{tpu_custom_call.1}
  #allocation0 [shape = 'u32[]', space=smem, size = 0x4, offset = 0x4, fixed_abs, tag = 'smem constant byte address 0x4 - core index']
  #allocation1 [shape = 'u32[144,128]{1,0:T(1,128)}', space=vmem, size = 0x12000, scoped, tag = 'internal scratch']
  %s0 = inlined_call_operand.vmem [shape: bf16[32,32], index: 0, kind: input, shape index: {}]
  %s1 = inlined_call_operand.vmem [shape: bf16[16,32], index: 1, kind: input, shape index: {}]
  %s2 = inlined_call_operand.vmem [shape: bf16[16,32], index: 2, kind: input, shape index: {}]
  %s3 = inlined_call_operand.vmem [shape: bf16[4,32,32], index: 3, kind: input, shape index: {}]
  %s4 = inlined_call_operand.vmem [shape: f32[4,1,32], index: 4, kind: input, shape index: {}]
  %s5 = inlined_call_operand.vmem [shape: bf16[256,32], index: 5, kind: input, shape index: {}]
  %s6 = inlined_call_operand.vmem [shape: f32[256,32], index: 6, kind: input, shape index: {}]
  %s7 = inlined_call_operand.vmem [shape: bf16[32,256], index: 7, kind: input, shape index: {}]
  %s8 = inlined_call_operand.vmem [shape: f32[16,256], index: 8, kind: input, shape index: {}]
  %s9 = inlined_call_operand.hbm [shape: f32[32,32], index: 9, kind: output, shape index: {}]
  %s10 = sld [smem:[#allocation0]]
  $region46: #{tpu_custom_call.1} parent=0
    _
  %s12 = ssub.s32 1, %s10
  %s13 = scalar_select 0, %s12, %s10
  $region1: #{tpu_custom_call.1} parent=0
    #allocation2 [shape = 'u8[16384]{0}', space=vmem, size = 0x4000, scoped, tag = 'output window, operand 0, single buffered']
    #allocation3 [shape = 's32[1]{0}', space=sflag, size = 0x4, scoped, tag = 'scoped memory for tpu_custom_call.1']
    %14 = vsyncpa [#allocation3], 0
    // Predicated region
    $region2: #{tpu_custom_call.1} parent=1 // pred_check
      _
    $region3: #{tpu_custom_call.1} parent=1 // pred_check_branch
      %16 = sbr.rel (0) target = $region5
    $region4: #{tpu_custom_call.1} parent=1 // pred_region
      _
    $region5: #{tpu_custom_call.1} parent=1 // pred_fallthru
      _
    // Predicated region
    $region6: #{tpu_custom_call.1} parent=1 // pred_check
      _
    $region7: #{tpu_custom_call.1} parent=1 // pred_check_branch
      %18 = sbr.rel (0) target = $region9
    $region8: #{tpu_custom_call.1} parent=1 // pred_region
      _
    $region9: #{tpu_custom_call.1} parent=1 // pred_fallthru
      _
    // Predicated region
    $region10: #{tpu_custom_call.1} parent=1 // pred_check
      _
    $region11: #{tpu_custom_call.1} parent=1 // pred_check_branch
      %20 = sbr.rel (0) target = $region13
    $region12: #{tpu_custom_call.1} parent=1 // pred_region
      _
    $region13: #{tpu_custom_call.1} parent=1 // pred_fallthru
      _
    // Predicated region
    $region14: #{tpu_custom_call.1} parent=1 // pred_check
      _
    $region15: #{tpu_custom_call.1} parent=1 // pred_check_branch
      %22 = sbr.rel (0) target = $region17
    $region16: #{tpu_custom_call.1} parent=1 // pred_region
      _
    $region17: #{tpu_custom_call.1} parent=1 // pred_fallthru
      _
    // Predicated region
    $region18: #{tpu_custom_call.1} parent=1 // pred_check
      _
    $region19: #{tpu_custom_call.1} parent=1 // pred_check_branch
      %24 = sbr.rel (0) target = $region21
    $region20: #{tpu_custom_call.1} parent=1 // pred_region
      _
    $region21: #{tpu_custom_call.1} parent=1 // pred_fallthru
      _
    // Predicated region
    $region22: #{tpu_custom_call.1} parent=1 // pred_check
      _
    $region23: #{tpu_custom_call.1} parent=1 // pred_check_branch
      %26 = sbr.rel (0) target = $region25
    $region24: #{tpu_custom_call.1} parent=1 // pred_region
      _
    $region25: #{tpu_custom_call.1} parent=1 // pred_fallthru
      _
    // Predicated region
    $region26: #{tpu_custom_call.1} parent=1 // pred_check
      _
    $region27: #{tpu_custom_call.1} parent=1 // pred_check_branch
      %28 = sbr.rel (0) target = $region29
    $region28: #{tpu_custom_call.1} parent=1 // pred_region
      _
    $region29: #{tpu_custom_call.1} parent=1 // pred_fallthru
      _
    // Predicated region
    $region30: #{tpu_custom_call.1} parent=1 // pred_check
      _
    $region31: #{tpu_custom_call.1} parent=1 // pred_check_branch
      %30 = sbr.rel (0) target = $region33
    $region32: #{tpu_custom_call.1} parent=1 // pred_region
      _
    $region33: #{tpu_custom_call.1} parent=1 // pred_fallthru
      _
    // Predicated region
    $region34: #{tpu_custom_call.1} parent=1 // pred_check
      _
    $region35: #{tpu_custom_call.1} parent=1 // pred_check_branch
      %32 = sbr.rel (0) target = $region37
    $region36: #{tpu_custom_call.1} parent=1 // pred_region
      _
    $region37: #{tpu_custom_call.1} parent=1 // pred_fallthru
      _
    %v34 = vld [vmem:[%s0] sm:$0xf]
    %v35 = vld [vmem:[%s0 + $0x4] sm:$0xf]
    %v36 = vld [vmem:[%s0 + $0x8] sm:$0xf]
    %v37 = vld [vmem:[%s0 + $0xc] sm:$0xf]
    %v38 = vld [vmem:[%s3] sm:$0xf]
    %v39 = vld [vmem:[%s3 + $0x4] sm:$0xf]
    %v40 = vld [vmem:[%s3 + $0x8] sm:$0xf]
    %v41 = vld [vmem:[%s3 + $0xc] sm:$0xf]
    %v42 = vld [vmem:[%s4] sm:$0x1]
    %v44 = vlaneseq
    %v45 = vshrl.u32 %v44, 7
    %v46 = vsub.s32 0, %v45
    %v47 = vrot.slane %v42, %v46
    %v53 = vunpack.c.l.b16 %v34
    %v54 = vunpack.c.l.b16 %v35
    %v55 = vunpack.c.l.b16 %v36
    %v56 = vunpack.c.l.b16 %v37
    %v57 = vpack.c.b16 %v54, %v53
    %v58 = vpack.c.b16 %v56, %v55
    %v63 = vunpack.c.l.b16 %v38
    %v64 = vunpack.c.l.b16 %v39
    %v65 = vunpack.c.l.b16 %v40
    %v66 = vunpack.c.l.b16 %v41
    %v67 = vpack.c.b16 %v64, %v63
    %v68 = vpack.c.b16 %v66, %v65
    %vm71 = vcmask 261120
    %v73 = vsel %vm71, %v57, 0
    %v76 = vsel %vm71, %v58, 0
    %78 = vmatprep.subr.bf16.mxu0 0
    %79 = vmatpush1.bf16.msra.mxu0 %v67
    %80 = vmatprep.subr.bf16.mxu0 0
    %81 = vmatpush1.bf16.msra.mxu0 %v68
    %82 = vmatprep.subr.bf16.mxu0 0
    %83 = vmatpush1.bf16.msra.mxu0 0
    %84 = vmatprep.subr.bf16.mxu0 0
    %85 = vmatpush1.bf16.msra.mxu0 0
    %86 = vmatprep.subr.bf16.mxu0 0
    %87 = vmatpush1.bf16.msra.mxu0 0
    %88 = vmatprep.subr.bf16.mxu0 0
    %89 = vmatpush1.bf16.msra.mxu0 0
    %90 = vmatprep.subr.bf16.mxu0 0
    %91 = vmatpush1.bf16.msra.mxu0 0
    %92 = vmatprep.subr.bf16.mxu0 0
    %93 = vmatpush1.bf16.msra.mxu0 0
    %94 = vmatprep.subr.bf16.mxu0 0
    %95 = vmatpush1.bf16.msra.mxu0 0
    %96 = vmatprep.subr.bf16.mxu0 0
    %97 = vmatpush1.bf16.msra.mxu0 0
    %98 = vmatprep.subr.bf16.mxu0 0
    %99 = vmatpush1.bf16.msra.mxu0 0
    %100 = vmatprep.subr.bf16.mxu0 0
    %101 = vmatpush1.bf16.msra.mxu0 0
    %102 = vmatprep.subr.bf16.mxu0 0
    %103 = vmatpush1.bf16.msra.mxu0 0
    %104 = vmatprep.subr.bf16.mxu0 0
    %105 = vmatpush1.bf16.msra.mxu0 0
    %106 = vmatprep.subr.bf16.mxu0 0
    %107 = vmatpush1.bf16.msra.mxu0 0
    %108 = vmatprep.subr.bf16.mxu0 0
    %109 = vmatpush1.bf16.msra.mxu0 0
    %110 = vmatprep.mubr.bf16.mxu0 0
    %111 = vmatmul.mubr.bf16.gmra.mrb[0].mxu0 %v73
    %v112 = vpop.f32.mrb[0].mxu0
    %v113 = vadd.f32 %v47, %v112
    %v114 = vpop.f32.mrb[0].mxu0
    %v115 = vpop.f32.mrb[0].mxu0
    %v116 = vadd.f32 %v47, %v115
    %v117 = vpop.f32.mrb[0].mxu0
    %118 = vmatprep.mubr.bf16.mxu0 0
    %119 = vmatmul.mubr.bf16.gmra.mrb[0].mxu0 %v76
    %v120 = vpop.f32.mrb[0].mxu0
    %v121 = vadd.f32 %v47, %v120
    %v122 = vpop.f32.mrb[0].mxu0
    %v123 = vpop.f32.mrb[0].mxu0
    %v124 = vadd.f32 %v47, %v123
    %v125 = vpop.f32.mrb[0].mxu0
    %126 = vdwg.mxu0
    %v127 = vld [vmem:[%s1] sm:$0xf]
    %v128 = vld [vmem:[%s1 + $0x4] sm:$0xf]
    %s129 = scalar_lea.vmem %s3, 16
    %v130 = vld [vmem:[%s129] sm:$0xf]
    %v131 = vld [vmem:[%s129 + $0x4] sm:$0xf]
    %v132 = vld [vmem:[%s129 + $0x8] sm:$0xf]
    %v133 = vld [vmem:[%s129 + $0xc] sm:$0xf]
    %s134 = scalar_lea.vmem %s4, 1
    %v135 = vld [vmem:[%s134] sm:$0x1]
    %v137 = vlaneseq
    %v138 = vshrl.u32 %v137, 7
    %v139 = vsub.s32 0, %v138
    %v140 = vrot.slane %v135, %v139
    %v144 = vunpack.c.l.b16 %v127
    %v145 = vunpack.c.l.b16 %v128
    %v146 = vpack.c.b16 %v145, %v144
    %v151 = vunpack.c.l.b16 %v130
    %v152 = vunpack.c.l.b16 %v131
    %v153 = vunpack.c.l.b16 %v132
    %v154 = vunpack.c.l.b16 %v133
    %v155 = vpack.c.b16 %v152, %v151
    %v156 = vpack.c.b16 %v154, %v153
    %v160 = vsel %vm71, %v146, 0
    %162 = vmatprep.subr.bf16.mxu0 0
    %163 = vmatpush1.bf16.msra.mxu0 %v155
    %164 = vmatprep.subr.bf16.mxu0 0
    %165 = vmatpush1.bf16.msra.mxu0 %v156
    %166 = vmatprep.subr.bf16.mxu0 0
    %167 = vmatpush1.bf16.msra.mxu0 0
    %168 = vmatprep.subr.bf16.mxu0 0
    %169 = vmatpush1.bf16.msra.mxu0 0
    %170 = vmatprep.subr.bf16.mxu0 0
    %171 = vmatpush1.bf16.msra.mxu0 0
    %172 = vmatprep.subr.bf16.mxu0 0
    %173 = vmatpush1.bf16.msra.mxu0 0
    %174 = vmatprep.subr.bf16.mxu0 0
    %175 = vmatpush1.bf16.msra.mxu0 0
    %176 = vmatprep.subr.bf16.mxu0 0
    %177 = vmatpush1.bf16.msra.mxu0 0
    %178 = vmatprep.subr.bf16.mxu0 0
    %179 = vmatpush1.bf16.msra.mxu0 0
    %180 = vmatprep.subr.bf16.mxu0 0
    %181 = vmatpush1.bf16.msra.mxu0 0
    %182 = vmatprep.subr.bf16.mxu0 0
    %183 = vmatpush1.bf16.msra.mxu0 0
    %184 = vmatprep.subr.bf16.mxu0 0
    %185 = vmatpush1.bf16.msra.mxu0 0
    %186 = vmatprep.subr.bf16.mxu0 0
    %187 = vmatpush1.bf16.msra.mxu0 0
    %188 = vmatprep.subr.bf16.mxu0 0
    %189 = vmatpush1.bf16.msra.mxu0 0
    %190 = vmatprep.subr.bf16.mxu0 0
    %191 = vmatpush1.bf16.msra.mxu0 0
    %192 = vmatprep.subr.bf16.mxu0 0
    %193 = vmatpush1.bf16.msra.mxu0 0
    %194 = vmatprep.mubr.bf16.mxu0 0
    %195 = vmatmul.mubr.bf16.gmra.mrb[0].mxu0 %v160
    %v196 = vpop.f32.mrb[0].mxu0
    %v197 = vadd.f32 %v140, %v196
    %v198 = vpop.f32.mrb[0].mxu0
    %v199 = vpop.f32.mrb[0].mxu0
    %v200 = vadd.f32 %v140, %v199
    %v201 = vpop.f32.mrb[0].mxu0
    %202 = vdwg.mxu0
    %v203 = vld [vmem:[%s2] sm:$0xf]
    %v204 = vld [vmem:[%s2 + $0x4] sm:$0xf]
    %s205 = scalar_lea.vmem %s3, 32
    %v206 = vld [vmem:[%s205] sm:$0xf]
    %v207 = vld [vmem:[%s205 + $0x4] sm:$0xf]
    %v208 = vld [vmem:[%s205 + $0x8] sm:$0xf]
    %v209 = vld [vmem:[%s205 + $0xc] sm:$0xf]
    %s210 = scalar_lea.vmem %s4, 2
    %v211 = vld [vmem:[%s210] sm:$0x1]
    %v213 = vlaneseq
    %v214 = vshrl.u32 %v213, 7
    %v215 = vsub.s32 0, %v214
    %v216 = vrot.slane %v211, %v215
    %v220 = vunpack.c.l.b16 %v203
    %v221 = vunpack.c.l.b16 %v204
    %v222 = vpack.c.b16 %v221, %v220
    %v227 = vunpack.c.l.b16 %v206
    %v228 = vunpack.c.l.b16 %v207
    %v229 = vunpack.c.l.b16 %v208
    %v230 = vunpack.c.l.b16 %v209
    %v231 = vpack.c.b16 %v228, %v227
    %v232 = vpack.c.b16 %v230, %v229
    %v236 = vsel %vm71, %v222, 0
    %238 = vmatprep.subr.bf16.mxu0 0
    %239 = vmatpush1.bf16.msra.mxu0 %v231
    %240 = vmatprep.subr.bf16.mxu0 0
    %241 = vmatpush1.bf16.msra.mxu0 %v232
    %242 = vmatprep.subr.bf16.mxu0 0
    %243 = vmatpush1.bf16.msra.mxu0 0
    %244 = vmatprep.subr.bf16.mxu0 0
    %245 = vmatpush1.bf16.msra.mxu0 0
    %246 = vmatprep.subr.bf16.mxu0 0
    %247 = vmatpush1.bf16.msra.mxu0 0
    %248 = vmatprep.subr.bf16.mxu0 0
    %249 = vmatpush1.bf16.msra.mxu0 0
    %250 = vmatprep.subr.bf16.mxu0 0
    %251 = vmatpush1.bf16.msra.mxu0 0
    %252 = vmatprep.subr.bf16.mxu0 0
    %253 = vmatpush1.bf16.msra.mxu0 0
    %254 = vmatprep.subr.bf16.mxu0 0
    %255 = vmatpush1.bf16.msra.mxu0 0
    %256 = vmatprep.subr.bf16.mxu0 0
    %257 = vmatpush1.bf16.msra.mxu0 0
    %258 = vmatprep.subr.bf16.mxu0 0
    %259 = vmatpush1.bf16.msra.mxu0 0
    %260 = vmatprep.subr.bf16.mxu0 0
    %261 = vmatpush1.bf16.msra.mxu0 0
    %262 = vmatprep.subr.bf16.mxu0 0
    %263 = vmatpush1.bf16.msra.mxu0 0
    %264 = vmatprep.subr.bf16.mxu0 0
    %265 = vmatpush1.bf16.msra.mxu0 0
    %266 = vmatprep.subr.bf16.mxu0 0
    %267 = vmatpush1.bf16.msra.mxu0 0
    %268 = vmatprep.subr.bf16.mxu0 0
    %269 = vmatpush1.bf16.msra.mxu0 0
    %270 = vmatprep.mubr.bf16.mxu0 0
    %271 = vmatmul.mubr.bf16.gmra.mrb[0].mxu0 %v236
    %v272 = vpop.f32.mrb[0].mxu0
    %v273 = vadd.f32 %v216, %v272
    %v274 = vpop.f32.mrb[0].mxu0
    %v275 = vpop.f32.mrb[0].mxu0
    %v276 = vadd.f32 %v216, %v275
    %v277 = vpop.f32.mrb[0].mxu0
    %278 = vdwg.mxu0
    %v279 = vld [vmem:[%s5] sm:$0xf]
    %v280 = vld [vmem:[%s5 + $0x4] sm:$0xf]
    %v281 = vld [vmem:[%s5 + $0x8] sm:$0xf]
    %v282 = vld [vmem:[%s5 + $0xc] sm:$0xf]
    %v283 = vld [vmem:[%s5 + $0x10] sm:$0xf]
    %v284 = vld [vmem:[%s5 + $0x14] sm:$0xf]
    %v285 = vld [vmem:[%s5 + $0x18] sm:$0xf]
    %v286 = vld [vmem:[%s5 + $0x1c] sm:$0xf]
    %v287 = vld [vmem:[%s5 + $0x20] sm:$0xf]
    %v288 = vld [vmem:[%s5 + $0x24] sm:$0xf]
    %v289 = vld [vmem:[%s5 + $0x28] sm:$0xf]
    %v290 = vld [vmem:[%s5 + $0x2c] sm:$0xf]
    %v291 = vld [vmem:[%s5 + $0x30] sm:$0xf]
    %v292 = vld [vmem:[%s5 + $0x34] sm:$0xf]
    %v293 = vld [vmem:[%s5 + $0x38] sm:$0xf]
    %v294 = vld [vmem:[%s5 + $0x3c] sm:$0xf]
    %v295 = vld [vmem:[%s5 + $0x40] sm:$0xf]
    %v296 = vld [vmem:[%s5 + $0x44] sm:$0xf]
    %v297 = vld [vmem:[%s5 + $0x48] sm:$0xf]
    %v298 = vld [vmem:[%s5 + $0x4c] sm:$0xf]
    %v299 = vld [vmem:[%s5 + $0x50] sm:$0xf]
    %v300 = vld [vmem:[%s5 + $0x54] sm:$0xf]
    %v301 = vld [vmem:[%s5 + $0x58] sm:$0xf]
    %v302 = vld [vmem:[%s5 + $0x5c] sm:$0xf]
    %v303 = vld [vmem:[%s5 + $0x60] sm:$0xf]
    %v304 = vld [vmem:[%s5 + $0x64] sm:$0xf]
    %v305 = vld [vmem:[%s5 + $0x68] sm:$0xf]
    %v306 = vld [vmem:[%s5 + $0x6c] sm:$0xf]
    %v307 = vld [vmem:[%s5 + $0x70] sm:$0xf]
    %v308 = vld [vmem:[%s5 + $0x74] sm:$0xf]
    %v309 = vld [vmem:[%s5 + $0x78] sm:$0xf]
    %v310 = vld [vmem:[%s5 + $0x7c] sm:$0xf]
    %v311 = vpack.c.bf16 %v116, %v113
    %v312 = vpack.c.bf16 %v124, %v121
    %v345 = vunpack.c.l.b16 %v279
    %v346 = vunpack.c.l.b16 %v280
    %v347 = vunpack.c.l.b16 %v281
    %v348 = vunpack.c.l.b16 %v282
    %v349 = vunpack.c.l.b16 %v283
    %v350 = vunpack.c.l.b16 %v284
    %v351 = vunpack.c.l.b16 %v285
    %v352 = vunpack.c.l.b16 %v286
    %v353 = vunpack.c.l.b16 %v287
    %v354 = vunpack.c.l.b16 %v288
    %v355 = vunpack.c.l.b16 %v289
    %v356 = vunpack.c.l.b16 %v290
    %v357 = vunpack.c.l.b16 %v291
    %v358 = vunpack.c.l.b16 %v292
    %v359 = vunpack.c.l.b16 %v293
    %v360 = vunpack.c.l.b16 %v294
    %v361 = vunpack.c.l.b16 %v295
    %v362 = vunpack.c.l.b16 %v296
    %v363 = vunpack.c.l.b16 %v297
    %v364 = vunpack.c.l.b16 %v298
    %v365 = vunpack.c.l.b16 %v299
    %v366 = vunpack.c.l.b16 %v300
    %v367 = vunpack.c.l.b16 %v301
    %v368 = vunpack.c.l.b16 %v302
    %v369 = vunpack.c.l.b16 %v303
    %v370 = vunpack.c.l.b16 %v304
    %v371 = vunpack.c.l.b16 %v305
    %v372 = vunpack.c.l.b16 %v306
    %v373 = vunpack.c.l.b16 %v307
    %v374 = vunpack.c.l.b16 %v308
    %v375 = vunpack.c.l.b16 %v309
    %v376 = vunpack.c.l.b16 %v310
    %v377 = vpack.c.b16 %v346, %v345
    %v378 = vpack.c.b16 %v348, %v347
    %v379 = vpack.c.b16 %v350, %v349
    %v380 = vpack.c.b16 %v352, %v351
    %v381 = vpack.c.b16 %v354, %v353
    %v382 = vpack.c.b16 %v356, %v355
    %v383 = vpack.c.b16 %v358, %v357
    %v384 = vpack.c.b16 %v360, %v359
    %v385 = vpack.c.b16 %v362, %v361
    %v386 = vpack.c.b16 %v364, %v363
    %v387 = vpack.c.b16 %v366, %v365
    %v388 = vpack.c.b16 %v368, %v367
    %v389 = vpack.c.b16 %v370, %v369
    %v390 = vpack.c.b16 %v372, %v371
    %v391 = vpack.c.b16 %v374, %v373
    %v392 = vpack.c.b16 %v376, %v375
    %v394 = vsel %vm71, %v377, 0
    %v397 = vsel %vm71, %v378, 0
    %v400 = vsel %vm71, %v379, 0
    %v403 = vsel %vm71, %v380, 0
    %v406 = vsel %vm71, %v381, 0
    %v409 = vsel %vm71, %v382, 0
    %v412 = vsel %vm71, %v383, 0
    %v415 = vsel %vm71, %v384, 0
    %v418 = vsel %vm71, %v385, 0
    %v421 = vsel %vm71, %v386, 0
    %v424 = vsel %vm71, %v387, 0
    %v427 = vsel %vm71, %v388, 0
    %v430 = vsel %vm71, %v389, 0
    %v433 = vsel %vm71, %v390, 0
    %v436 = vsel %vm71, %v391, 0
    %v439 = vsel %vm71, %v392, 0
    %441 = vmatprep.subr.bf16.mxu0 0
    %442 = vmatpush1.bf16.msra.mxu0 %v311
    %443 = vmatprep.subr.bf16.mxu0 0
    %444 = vmatpush1.bf16.msra.mxu0 %v312
    %445 = vmatprep.subr.bf16.mxu0 0
    %446 = vmatpush1.bf16.msra.mxu0 0
    %447 = vmatprep.subr.bf16.mxu0 0
    %448 = vmatpush1.bf16.msra.mxu0 0
    %449 = vmatprep.subr.bf16.mxu0 0
    %450 = vmatpush1.bf16.msra.mxu0 0
    %451 = vmatprep.subr.bf16.mxu0 0
    %452 = vmatpush1.bf16.msra.mxu0 0
    %453 = vmatprep.subr.bf16.mxu0 0
    %454 = vmatpush1.bf16.msra.mxu0 0
    %455 = vmatprep.subr.bf16.mxu0 0
    %456 = vmatpush1.bf16.msra.mxu0 0
    %457 = vmatprep.subr.bf16.mxu0 0
    %458 = vmatpush1.bf16.msra.mxu0 0
    %459 = vmatprep.subr.bf16.mxu0 0
    %460 = vmatpush1.bf16.msra.mxu0 0
    %461 = vmatprep.subr.bf16.mxu0 0
    %462 = vmatpush1.bf16.msra.mxu0 0
    %463 = vmatprep.subr.bf16.mxu0 0
    %464 = vmatpush1.bf16.msra.mxu0 0
    %465 = vmatprep.subr.bf16.mxu0 0
    %466 = vmatpush1.bf16.msra.mxu0 0
    %467 = vmatprep.subr.bf16.mxu0 0
    %468 = vmatpush1.bf16.msra.mxu0 0
    %469 = vmatprep.subr.bf16.mxu0 0
    %470 = vmatpush1.bf16.msra.mxu0 0
    %471 = vmatprep.subr.bf16.mxu0 0
    %472 = vmatpush1.bf16.msra.mxu0 0
    %473 = vmatprep.mubr.bf16.mxu0 0
    %474 = vmatmul.mubr.bf16.gmra.mrb[0].mxu0 %v394
    %v475 = vpop.f32.mrb[0].mxu0
    %v476 = vadd.f32 0.0, %v475
    %v477 = vpop.f32.mrb[0].mxu0
    %v478 = vpop.f32.mrb[0].mxu0
    %v479 = vadd.f32 0.0, %v478
    %v480 = vpop.f32.mrb[0].mxu0
    %481 = vmatprep.mubr.bf16.mxu0 0
    %482 = vmatmul.mubr.bf16.gmra.mrb[0].mxu0 %v397
    %v483 = vpop.f32.mrb[0].mxu0
    %v484 = vadd.f32 0.0, %v483
    %v485 = vpop.f32.mrb[0].mxu0
    %v486 = vpop.f32.mrb[0].mxu0
    %v487 = vadd.f32 0.0, %v486
    %v488 = vpop.f32.mrb[0].mxu0
    %489 = vmatprep.mubr.bf16.mxu0 0
    %490 = vmatmul.mubr.bf16.gmra.mrb[0].mxu0 %v400
    %v491 = vpop.f32.mrb[0].mxu0
    %v492 = vadd.f32 0.0, %v491
    %v493 = vpop.f32.mrb[0].mxu0
    %v494 = vpop.f32.mrb[0].mxu0
    %v495 = vadd.f32 0.0, %v494
    %v496 = vpop.f32.mrb[0].mxu0
    %497 = vmatprep.mubr.bf16.mxu0 0
    %498 = vmatmul.mubr.bf16.gmra.mrb[0].mxu0 %v403
    %v499 = vpop.f32.mrb[0].mxu0
    %v500 = vadd.f32 0.0, %v499
    %v501 = vpop.f32.mrb[0].mxu0
    %v502 = vpop.f32.mrb[0].mxu0
    %v503 = vadd.f32 0.0, %v502
    %v504 = vpop.f32.mrb[0].mxu0
    %505 = vmatprep.mubr.bf16.mxu0 0
    %506 = vmatmul.mubr.bf16.gmra.mrb[0].mxu0 %v406
    %v507 = vpop.f32.mrb[0].mxu0
    %v508 = vadd.f32 0.0, %v507
    %v509 = vpop.f32.mrb[0].mxu0
    %v510 = vpop.f32.mrb[0].mxu0
    %v511 = vadd.f32 0.0, %v510
    %v512 = vpop.f32.mrb[0].mxu0
    %513 = vmatprep.mubr.bf16.mxu0 0
    %514 = vmatmul.mubr.bf16.gmra.mrb[0].mxu0 %v409
    %v515 = vpop.f32.mrb[0].mxu0
    %v516 = vadd.f32 0.0, %v515
    %v517 = vpop.f32.mrb[0].mxu0
    %v518 = vpop.f32.mrb[0].mxu0
    %v519 = vadd.f32 0.0, %v518
    %v520 = vpop.f32.mrb[0].mxu0
    %521 = vmatprep.mubr.bf16.mxu0 0
    %522 = vmatmul.mubr.bf16.gmra.mrb[0].mxu0 %v412
    %v523 = vpop.f32.mrb[0].mxu0
    %v524 = vadd.f32 0.0, %v523
    %v525 = vpop.f32.mrb[0].mxu0
    %v526 = vpop.f32.mrb[0].mxu0
    %v527 = vadd.f32 0.0, %v526
    %v528 = vpop.f32.mrb[0].mxu0
    %529 = vmatprep.mubr.bf16.mxu0 0
    %530 = vmatmul.mubr.bf16.gmra.mrb[0].mxu0 %v415
    %v531 = vpop.f32.mrb[0].mxu0
    %v532 = vadd.f32 0.0, %v531
    %v533 = vpop.f32.mrb[0].mxu0
    %v534 = vpop.f32.mrb[0].mxu0
    %v535 = vadd.f32 0.0, %v534
    %v536 = vpop.f32.mrb[0].mxu0
    %537 = vmatprep.mubr.bf16.mxu0 0
    %538 = vmatmul.mubr.bf16.gmra.mrb[0].mxu0 %v418
    %v539 = vpop.f32.mrb[0].mxu0
    %v540 = vadd.f32 0.0, %v539
    %v541 = vpop.f32.mrb[0].mxu0
    %v542 = vpop.f32.mrb[0].mxu0
    %v543 = vadd.f32 0.0, %v542
    %v544 = vpop.f32.mrb[0].mxu0
    %545 = vmatprep.mubr.bf16.mxu0 0
    %546 = vmatmul.mubr.bf16.gmra.mrb[0].mxu0 %v421
    %v547 = vpop.f32.mrb[0].mxu0
    %v548 = vadd.f32 0.0, %v547
    %v549 = vpop.f32.mrb[0].mxu0
    %v550 = vpop.f32.mrb[0].mxu0
    %v551 = vadd.f32 0.0, %v550
    %v552 = vpop.f32.mrb[0].mxu0
    %553 = vmatprep.mubr.bf16.mxu0 0
    %554 = vmatmul.mubr.bf16.gmra.mrb[0].mxu0 %v424
    %v555 = vpop.f32.mrb[0].mxu0
    %v556 = vadd.f32 0.0, %v555
    %v557 = vpop.f32.mrb[0].mxu0
    %v558 = vpop.f32.mrb[0].mxu0
    %v559 = vadd.f32 0.0, %v558
    %v560 = vpop.f32.mrb[0].mxu0
    %561 = vmatprep.mubr.bf16.mxu0 0
    %562 = vmatmul.mubr.bf16.gmra.mrb[0].mxu0 %v427
    %v563 = vpop.f32.mrb[0].mxu0
    %v564 = vadd.f32 0.0, %v563
    %v565 = vpop.f32.mrb[0].mxu0
    %v566 = vpop.f32.mrb[0].mxu0
    %v567 = vadd.f32 0.0, %v566
    %v568 = vpop.f32.mrb[0].mxu0
    %569 = vmatprep.mubr.bf16.mxu0 0
    %570 = vmatmul.mubr.bf16.gmra.mrb[0].mxu0 %v430
    %v571 = vpop.f32.mrb[0].mxu0
    %v572 = vadd.f32 0.0, %v571
    %v573 = vpop.f32.mrb[0].mxu0
    %v574 = vpop.f32.mrb[0].mxu0
    %v575 = vadd.f32 0.0, %v574
    %v576 = vpop.f32.mrb[0].mxu0
    %577 = vmatprep.mubr.bf16.mxu0 0
    %578 = vmatmul.mubr.bf16.gmra.mrb[0].mxu0 %v433
    %v579 = vpop.f32.mrb[0].mxu0
    %v580 = vadd.f32 0.0, %v579
    %v581 = vpop.f32.mrb[0].mxu0
    %v582 = vpop.f32.mrb[0].mxu0
    %v583 = vadd.f32 0.0, %v582
    %v584 = vpop.f32.mrb[0].mxu0
    %585 = vmatprep.mubr.bf16.mxu0 0
    %586 = vmatmul.mubr.bf16.gmra.mrb[0].mxu0 %v436
    %v587 = vpop.f32.mrb[0].mxu0
    %v588 = vadd.f32 0.0, %v587
    %v589 = vpop.f32.mrb[0].mxu0
    %v590 = vpop.f32.mrb[0].mxu0
    %v591 = vadd.f32 0.0, %v590
    %v592 = vpop.f32.mrb[0].mxu0
    %593 = vmatprep.mubr.bf16.mxu0 0
    %594 = vmatmul.mubr.bf16.gmra.mrb[0].mxu0 %v439
    %v595 = vpop.f32.mrb[0].mxu0
    %v596 = vadd.f32 0.0, %v595
    %v597 = vpop.f32.mrb[0].mxu0
    %v598 = vpop.f32.mrb[0].mxu0
    %v599 = vadd.f32 0.0, %v598
    %v600 = vpop.f32.mrb[0].mxu0
    %601 = vdwg.mxu0
    %v602 = vld [vmem:[%s6] sm:$0xff]
    %v603 = vld [vmem:[%s6 + $0x8] sm:$0xff]
    %v604 = vld [vmem:[%s6 + $0x10] sm:$0xff]
    %v605 = vld [vmem:[%s6 + $0x18] sm:$0xff]
    %v606 = vld [vmem:[%s6 + $0x20] sm:$0xff]
    %v607 = vld [vmem:[%s6 + $0x28] sm:$0xff]
    %v608 = vld [vmem:[%s6 + $0x30] sm:$0xff]
    %v609 = vld [vmem:[%s6 + $0x38] sm:$0xff]
    %v610 = vld [vmem:[%s6 + $0x40] sm:$0xff]
    %v611 = vld [vmem:[%s6 + $0x48] sm:$0xff]
    %v612 = vld [vmem:[%s6 + $0x50] sm:$0xff]
    %v613 = vld [vmem:[%s6 + $0x58] sm:$0xff]
    %v614 = vld [vmem:[%s6 + $0x60] sm:$0xff]
    %v615 = vld [vmem:[%s6 + $0x68] sm:$0xff]
    %v616 = vld [vmem:[%s6 + $0x70] sm:$0xff]
    %v617 = vld [vmem:[%s6 + $0x78] sm:$0xff]
    %v618 = vld [vmem:[%s6 + $0x80] sm:$0xff]
    %v619 = vld [vmem:[%s6 + $0x88] sm:$0xff]
    %v620 = vld [vmem:[%s6 + $0x90] sm:$0xff]
    %v621 = vld [vmem:[%s6 + $0x98] sm:$0xff]
    %v622 = vld [vmem:[%s6 + $0xa0] sm:$0xff]
    %v623 = vld [vmem:[%s6 + $0xa8] sm:$0xff]
    %v624 = vld [vmem:[%s6 + $0xb0] sm:$0xff]
    %v625 = vld [vmem:[%s6 + $0xb8] sm:$0xff]
    %v626 = vld [vmem:[%s6 + $0xc0] sm:$0xff]
    %v627 = vld [vmem:[%s6 + $0xc8] sm:$0xff]
    %v628 = vld [vmem:[%s6 + $0xd0] sm:$0xff]
    %v629 = vld [vmem:[%s6 + $0xd8] sm:$0xff]
    %v630 = vld [vmem:[%s6 + $0xe0] sm:$0xff]
    %v631 = vld [vmem:[%s6 + $0xe8] sm:$0xff]
    %v632 = vld [vmem:[%s6 + $0xf0] sm:$0xff]
    %v633 = vld [vmem:[%s6 + $0xf8] sm:$0xff]
    %v634 = vmul.f32 %v476, %v602
    %v635 = vmul.f32 %v479, %v603
    %v636 = vmul.f32 %v484, %v604
    %v637 = vmul.f32 %v487, %v605
    %v638 = vmul.f32 %v492, %v606
    %v639 = vmul.f32 %v495, %v607
    %v640 = vmul.f32 %v500, %v608
    %v641 = vmul.f32 %v503, %v609
    %v642 = vmul.f32 %v508, %v610
    %v643 = vmul.f32 %v511, %v611
    %v644 = vmul.f32 %v516, %v612
    %v645 = vmul.f32 %v519, %v613
    %v646 = vmul.f32 %v524, %v614
    %v647 = vmul.f32 %v527, %v615
    %v648 = vmul.f32 %v532, %v616
    %v649 = vmul.f32 %v535, %v617
    %v650 = vmul.f32 %v540, %v618
    %v651 = vmul.f32 %v543, %v619
    %v652 = vmul.f32 %v548, %v620
    %v653 = vmul.f32 %v551, %v621
    %v654 = vmul.f32 %v556, %v622
    %v655 = vmul.f32 %v559, %v623
    %v656 = vmul.f32 %v564, %v624
    %v657 = vmul.f32 %v567, %v625
    %v658 = vmul.f32 %v572, %v626
    %v659 = vmul.f32 %v575, %v627
    %v660 = vmul.f32 %v580, %v628
    %v661 = vmul.f32 %v583, %v629
    %v662 = vmul.f32 %v588, %v630
    %v663 = vmul.f32 %v591, %v631
    %v664 = vmul.f32 %v596, %v632
    %v665 = vmul.f32 %v599, %v633
    %v666 = vpack.c.bf16 %v200, %v197
    %v667 = vpack.c.bf16 %v635, %v634
    %v668 = vpack.c.bf16 %v637, %v636
    %v669 = vpack.c.bf16 %v639, %v638
    %v670 = vpack.c.bf16 %v641, %v640
    %v671 = vpack.c.bf16 %v643, %v642
    %v672 = vpack.c.bf16 %v645, %v644
    %v673 = vpack.c.bf16 %v647, %v646
    %v674 = vpack.c.bf16 %v649, %v648
    %v675 = vpack.c.bf16 %v651, %v650
    %v676 = vpack.c.bf16 %v653, %v652
    %v677 = vpack.c.bf16 %v655, %v654
    %v678 = vpack.c.bf16 %v657, %v656
    %v679 = vpack.c.bf16 %v659, %v658
    %v680 = vpack.c.bf16 %v661, %v660
    %v681 = vpack.c.bf16 %v663, %v662
    %v682 = vpack.c.bf16 %v665, %v664
    %v683 = vld [vmem:[%s8] sm:$0xff]
    %v684 = vld [vmem:[%s8 + $0x8] sm:$0xff]
    %v685 = vld [vmem:[%s8 + $0x10] sm:$0xff]
    %v686 = vld [vmem:[%s8 + $0x18] sm:$0xff]
    %v688 = vsel %vm71, %v666, 0
    %v691 = vsel %vm71, %v667, 0
    %v694 = vsel %vm71, %v668, 0
    %v697 = vsel %vm71, %v669, 0
    %v700 = vsel %vm71, %v670, 0
    %v703 = vsel %vm71, %v671, 0
    %v706 = vsel %vm71, %v672, 0
    %v709 = vsel %vm71, %v673, 0
    %v712 = vsel %vm71, %v674, 0
    %v715 = vsel %vm71, %v675, 0
    %v718 = vsel %vm71, %v676, 0
    %v721 = vsel %vm71, %v677, 0
    %v724 = vsel %vm71, %v678, 0
    %v727 = vsel %vm71, %v679, 0
    %v730 = vsel %vm71, %v680, 0
    %v733 = vsel %vm71, %v681, 0
    %v736 = vsel %vm71, %v682, 0
    %738 = vmatprep.subr.bf16.mxu0 0
    %739 = vmatpush1.bf16.xpose.msra.mxu0 %v691
    %740 = vmatprep.subr.bf16.mxu0 0
    %741 = vmatpush1.bf16.xpose.msra.mxu0 %v694
    %742 = vmatprep.subr.bf16.mxu0 0
    %743 = vmatpush1.bf16.xpose.msra.mxu0 %v697
    %744 = vmatprep.subr.bf16.mxu0 0
    %745 = vmatpush1.bf16.xpose.msra.mxu0 %v700
    %746 = vmatprep.subr.bf16.mxu0 0
    %747 = vmatpush1.bf16.xpose.msra.mxu0 %v703
    %748 = vmatprep.subr.bf16.mxu0 0
    %749 = vmatpush1.bf16.xpose.msra.mxu0 %v706
    %750 = vmatprep.subr.bf16.mxu0 0
    %751 = vmatpush1.bf16.xpose.msra.mxu0 %v709
    %752 = vmatprep.subr.bf16.mxu0 0
    %753 = vmatpush1.bf16.xpose.msra.mxu0 %v712
    %754 = vmatprep.subr.bf16.mxu0 0
    %755 = vmatpush1.bf16.xpose.msra.mxu0 %v715
    %756 = vmatprep.subr.bf16.mxu0 0
    %757 = vmatpush1.bf16.xpose.msra.mxu0 %v718
    %758 = vmatprep.subr.bf16.mxu0 0
    %759 = vmatpush1.bf16.xpose.msra.mxu0 %v721
    %760 = vmatprep.subr.bf16.mxu0 0
    %761 = vmatpush1.bf16.xpose.msra.mxu0 %v724
    %762 = vmatprep.subr.bf16.mxu0 0
    %763 = vmatpush1.bf16.xpose.msra.mxu0 %v727
    %764 = vmatprep.subr.bf16.mxu0 0
    %765 = vmatpush1.bf16.xpose.msra.mxu0 %v730
    %766 = vmatprep.subr.bf16.mxu0 0
    %767 = vmatpush1.bf16.xpose.msra.mxu0 %v733
    %768 = vmatprep.subr.bf16.mxu0 0
    %769 = vmatpush1.bf16.xpose.msra.mxu0 %v736
    %770 = vmatprep.mubr.bf16.mxu0 0
    %771 = vmatmul.mubr.bf16.gmra.mrb[0].mxu0 %v688
    %v772 = vpop.f32.mrb[0].mxu0
    %v773 = vadd.f32 %v683, %v772
    %v774 = vpop.f32.mrb[0].mxu0
    %v775 = vadd.f32 %v684, %v774
    %v776 = vpop.f32.mrb[0].mxu0
    %v777 = vadd.f32 %v685, %v776
    %v778 = vpop.f32.mrb[0].mxu0
    %v779 = vadd.f32 %v686, %v778
    %780 = vdwg.mxu0
    %v781 = vmax.f32 %v773, %v777
    %v782 = vrot.slane %v781, 4
    %v783 = vmax.f32 %v781, %v782
    %v784 = vrot.slane %v783, 2
    %v785 = vmax.f32 %v783, %v784
    %v786 = vrot.slane %v785, 1
    %v787 = vmax.f32 %v785, %v786
    %v788 = vmax.f32 %v775, %v779
    %v789 = vrot.slane %v788, 4
    %v790 = vmax.f32 %v788, %v789
    %v791 = vrot.slane %v790, 2
    %v792 = vmax.f32 %v790, %v791
    %v793 = vrot.slane %v792, 1
    %v794 = vmax.f32 %v792, %v793
    %v795 = vsub.f32 %v773, %v787
    %v796 = vsub.f32 %v775, %v794
    %v797 = vsub.f32 %v777, %v787
    %v798 = vsub.f32 %v779, %v794
    %v799 = vmul.f32 %v795, 1.442695
    %v800 = vpow.pop %v799
    %v801 = vmul.f32 %v796, 1.442695
    %v802 = vpow.pop %v801
    %v803 = vmul.f32 %v797, 1.442695
    %v804 = vpow.pop %v803
    %v805 = vmul.f32 %v798, 1.442695
    %v806 = vpow.pop %v805
    %v807 = vadd.f32 %v800, %v804
    %v808 = vrot.slane %v807, 4
    %v809 = vadd.f32 %v807, %v808
    %v810 = vrot.slane %v809, 2
    %v811 = vadd.f32 %v809, %v810
    %v812 = vrot.slane %v811, 1
    %v813 = vadd.f32 %v811, %v812
    %v814 = vadd.f32 %v802, %v806
    %v815 = vrot.slane %v814, 4
    %v816 = vadd.f32 %v814, %v815
    %v817 = vrot.slane %v816, 2
    %v818 = vadd.f32 %v816, %v817
    %v819 = vrot.slane %v818, 1
    %v820 = vadd.f32 %v818, %v819
    %v821 = vrcp.pop %v813
    %v822 = vrcp.pop %v820
    %v823 = vmul.f32 %v800, %v821
    %v824 = vmul.f32 %v802, %v822
    %v825 = vmul.f32 %v804, %v821
    %v826 = vmul.f32 %v806, %v822
    %v827 = vpack.c.bf16 %v825, %v823
    %v828 = vpack.c.bf16 %v826, %v824
    %v829 = vpack.c.bf16 %v276, %v273
    %830 = vxpose.xlu0.c.b16.start [1/8] %v827, 128
    %831 = vxpose.xlu0.c.b16.cont [2/8] 0, 128
    %832 = vxpose.xlu0.c.b16.cont [3/8] 0, 128
    %833 = vxpose.xlu0.c.b16.cont [4/8] 0, 128
    %834 = vxpose.xlu0.c.b16.cont [5/8] 0, 128
    %835 = vxpose.xlu0.c.b16.cont [6/8] 0, 128
    %836 = vxpose.xlu0.c.b16.cont [7/8] 0, 128
    %837 = vxpose.xlu0.c.b16.end [8/8] 0, 128
    %v838 = vpop.trf.xlu0
    %v839 = vpop.trf.xlu0
    %v840 = vpop.trf.xlu0
    %v841 = vpop.trf.xlu0
    %v842 = vpop.trf.xlu0
    %v843 = vpop.trf.xlu0
    %v844 = vpop.trf.xlu0
    %v845 = vpop.trf.xlu0
    %846 = vxpose.xlu0.c.b16.start [1/8] %v828, 128
    %847 = vxpose.xlu0.c.b16.cont [2/8] 0, 128
    %848 = vxpose.xlu0.c.b16.cont [3/8] 0, 128
    %849 = vxpose.xlu0.c.b16.cont [4/8] 0, 128
    %850 = vxpose.xlu0.c.b16.cont [5/8] 0, 128
    %851 = vxpose.xlu0.c.b16.cont [6/8] 0, 128
    %852 = vxpose.xlu0.c.b16.cont [7/8] 0, 128
    %853 = vxpose.xlu0.c.b16.end [8/8] 0, 128
    %v854 = vpop.trf.xlu0
    %v855 = vpop.trf.xlu0
    %v856 = vpop.trf.xlu0
    %v857 = vpop.trf.xlu0
    %v858 = vpop.trf.xlu0
    %v859 = vpop.trf.xlu0
    %v860 = vpop.trf.xlu0
    %v861 = vpop.trf.xlu0
    %vm862 = vcmask 130048
    %v864 = vsel %vm862, %v838, 0
    %v867 = vsel %vm862, %v839, 0
    %v870 = vsel %vm862, %v840, 0
    %v873 = vsel %vm862, %v841, 0
    %v876 = vsel %vm862, %v842, 0
    %v879 = vsel %vm862, %v843, 0
    %v882 = vsel %vm862, %v844, 0
    %v885 = vsel %vm862, %v845, 0
    %v888 = vsel %vm862, %v854, 0
    %v891 = vsel %vm862, %v855, 0
    %v894 = vsel %vm862, %v856, 0
    %v897 = vsel %vm862, %v857, 0
    %v900 = vsel %vm862, %v858, 0
    %v903 = vsel %vm862, %v859, 0
    %v906 = vsel %vm862, %v860, 0
    %v909 = vsel %vm862, %v861, 0
    %911 = vmatprep.subr.bf16.mxu0 0
    %912 = vmatpush1.bf16.msra.mxu0 %v829
    %913 = vmatprep.subr.bf16.mxu0 0
    %914 = vmatpush1.bf16.msra.mxu0 0
    %915 = vmatprep.subr.bf16.mxu0 0
    %916 = vmatpush1.bf16.msra.mxu0 0
    %917 = vmatprep.subr.bf16.mxu0 0
    %918 = vmatpush1.bf16.msra.mxu0 0
    %919 = vmatprep.subr.bf16.mxu0 0
    %920 = vmatpush1.bf16.msra.mxu0 0
    %921 = vmatprep.subr.bf16.mxu0 0
    %922 = vmatpush1.bf16.msra.mxu0 0
    %923 = vmatprep.subr.bf16.mxu0 0
    %924 = vmatpush1.bf16.msra.mxu0 0
    %925 = vmatprep.subr.bf16.mxu0 0
    %926 = vmatpush1.bf16.msra.mxu0 0
    %927 = vmatprep.subr.bf16.mxu0 0
    %928 = vmatpush1.bf16.msra.mxu0 0
    %929 = vmatprep.subr.bf16.mxu0 0
    %930 = vmatpush1.bf16.msra.mxu0 0
    %931 = vmatprep.subr.bf16.mxu0 0
    %932 = vmatpush1.bf16.msra.mxu0 0
    %933 = vmatprep.subr.bf16.mxu0 0
    %934 = vmatpush1.bf16.msra.mxu0 0
    %935 = vmatprep.subr.bf16.mxu0 0
    %936 = vmatpush1.bf16.msra.mxu0 0
    %937 = vmatprep.subr.bf16.mxu0 0
    %938 = vmatpush1.bf16.msra.mxu0 0
    %939 = vmatprep.subr.bf16.mxu0 0
    %940 = vmatpush1.bf16.msra.mxu0 0
    %941 = vmatprep.subr.bf16.mxu0 0
    %942 = vmatpush1.bf16.msra.mxu0 0
    %943 = vmatprep.mubr.bf16.mxu0 0
    %944 = vmatmul.mubr.bf16.gmra.mrb[0].mxu0 %v864
    %v945 = vpop.f32.mrb[0].mxu0
    %v946 = vadd.f32 0.0, %v945
    %v947 = vpop.f32.mrb[0].mxu0
    %v948 = vpop.f32.mrb[0].mxu0
    %v949 = vadd.f32 0.0, %v948
    %v950 = vpop.f32.mrb[0].mxu0
    %951 = vmatprep.mubr.bf16.mxu0 0
    %952 = vmatmul.mubr.bf16.gmra.mrb[0].mxu0 %v867
    %v953 = vpop.f32.mrb[0].mxu0
    %v954 = vadd.f32 0.0, %v953
    %v955 = vpop.f32.mrb[0].mxu0
    %v956 = vpop.f32.mrb[0].mxu0
    %v957 = vadd.f32 0.0, %v956
    %v958 = vpop.f32.mrb[0].mxu0
    %959 = vmatprep.mubr.bf16.mxu0 0
    %960 = vmatmul.mubr.bf16.gmra.mrb[0].mxu0 %v870
    %v961 = vpop.f32.mrb[0].mxu0
    %v962 = vadd.f32 0.0, %v961
    %v963 = vpop.f32.mrb[0].mxu0
    %v964 = vpop.f32.mrb[0].mxu0
    %v965 = vadd.f32 0.0, %v964
    %v966 = vpop.f32.mrb[0].mxu0
    %967 = vmatprep.mubr.bf16.mxu0 0
    %968 = vmatmul.mubr.bf16.gmra.mrb[0].mxu0 %v873
    %v969 = vpop.f32.mrb[0].mxu0
    %v970 = vadd.f32 0.0, %v969
    %v971 = vpop.f32.mrb[0].mxu0
    %v972 = vpop.f32.mrb[0].mxu0
    %v973 = vadd.f32 0.0, %v972
    %v974 = vpop.f32.mrb[0].mxu0
    %975 = vmatprep.mubr.bf16.mxu0 0
    %976 = vmatmul.mubr.bf16.gmra.mrb[0].mxu0 %v876
    %v977 = vpop.f32.mrb[0].mxu0
    %v978 = vadd.f32 0.0, %v977
    %v979 = vpop.f32.mrb[0].mxu0
    %v980 = vpop.f32.mrb[0].mxu0
    %v981 = vadd.f32 0.0, %v980
    %v982 = vpop.f32.mrb[0].mxu0
    %983 = vmatprep.mubr.bf16.mxu0 0
    %984 = vmatmul.mubr.bf16.gmra.mrb[0].mxu0 %v879
    %v985 = vpop.f32.mrb[0].mxu0
    %v986 = vadd.f32 0.0, %v985
    %v987 = vpop.f32.mrb[0].mxu0
    %v988 = vpop.f32.mrb[0].mxu0
    %v989 = vadd.f32 0.0, %v988
    %v990 = vpop.f32.mrb[0].mxu0
    %991 = vmatprep.mubr.bf16.mxu0 0
    %992 = vmatmul.mubr.bf16.gmra.mrb[0].mxu0 %v882
    %v993 = vpop.f32.mrb[0].mxu0
    %v994 = vadd.f32 0.0, %v993
    %v995 = vpop.f32.mrb[0].mxu0
    %v996 = vpop.f32.mrb[0].mxu0
    %v997 = vadd.f32 0.0, %v996
    %v998 = vpop.f32.mrb[0].mxu0
    %999 = vmatprep.mubr.bf16.mxu0 0
    %1000 = vmatmul.mubr.bf16.gmra.mrb[0].mxu0 %v885
    %v1001 = vpop.f32.mrb[0].mxu0
    %v1002 = vadd.f32 0.0, %v1001
    %v1003 = vpop.f32.mrb[0].mxu0
    %v1004 = vpop.f32.mrb[0].mxu0
    %v1005 = vadd.f32 0.0, %v1004
    %v1006 = vpop.f32.mrb[0].mxu0
    %1007 = vmatprep.mubr.bf16.mxu0 0
    %1008 = vmatmul.mubr.bf16.gmra.mrb[0].mxu0 %v888
    %v1009 = vpop.f32.mrb[0].mxu0
    %v1010 = vadd.f32 0.0, %v1009
    %v1011 = vpop.f32.mrb[0].mxu0
    %v1012 = vpop.f32.mrb[0].mxu0
    %v1013 = vadd.f32 0.0, %v1012
    %v1014 = vpop.f32.mrb[0].mxu0
    %1015 = vmatprep.mubr.bf16.mxu0 0
    %1016 = vmatmul.mubr.bf16.gmra.mrb[0].mxu0 %v891
    %v1017 = vpop.f32.mrb[0].mxu0
    %v1018 = vadd.f32 0.0, %v1017
    %v1019 = vpop.f32.mrb[0].mxu0
    %v1020 = vpop.f32.mrb[0].mxu0
    %v1021 = vadd.f32 0.0, %v1020
    %v1022 = vpop.f32.mrb[0].mxu0
    %1023 = vmatprep.mubr.bf16.mxu0 0
    %1024 = vmatmul.mubr.bf16.gmra.mrb[0].mxu0 %v894
    %v1025 = vpop.f32.mrb[0].mxu0
    %v1026 = vadd.f32 0.0, %v1025
    %v1027 = vpop.f32.mrb[0].mxu0
    %v1028 = vpop.f32.mrb[0].mxu0
    %v1029 = vadd.f32 0.0, %v1028
    %v1030 = vpop.f32.mrb[0].mxu0
    %1031 = vmatprep.mubr.bf16.mxu0 0
    %1032 = vmatmul.mubr.bf16.gmra.mrb[0].mxu0 %v897
    %v1033 = vpop.f32.mrb[0].mxu0
    %v1034 = vadd.f32 0.0, %v1033
    %v1035 = vpop.f32.mrb[0].mxu0
    %v1036 = vpop.f32.mrb[0].mxu0
    %v1037 = vadd.f32 0.0, %v1036
    %v1038 = vpop.f32.mrb[0].mxu0
    %1039 = vmatprep.mubr.bf16.mxu0 0
    %1040 = vmatmul.mubr.bf16.gmra.mrb[0].mxu0 %v900
    %v1041 = vpop.f32.mrb[0].mxu0
    %v1042 = vadd.f32 0.0, %v1041
    %v1043 = vpop.f32.mrb[0].mxu0
    %v1044 = vpop.f32.mrb[0].mxu0
    %v1045 = vadd.f32 0.0, %v1044
    %v1046 = vpop.f32.mrb[0].mxu0
    %1047 = vmatprep.mubr.bf16.mxu0 0
    %1048 = vmatmul.mubr.bf16.gmra.mrb[0].mxu0 %v903
    %v1049 = vpop.f32.mrb[0].mxu0
    %v1050 = vadd.f32 0.0, %v1049
    %v1051 = vpop.f32.mrb[0].mxu0
    %v1052 = vpop.f32.mrb[0].mxu0
    %v1053 = vadd.f32 0.0, %v1052
    %v1054 = vpop.f32.mrb[0].mxu0
    %1055 = vmatprep.mubr.bf16.mxu0 0
    %1056 = vmatmul.mubr.bf16.gmra.mrb[0].mxu0 %v906
    %v1057 = vpop.f32.mrb[0].mxu0
    %v1058 = vadd.f32 0.0, %v1057
    %v1059 = vpop.f32.mrb[0].mxu0
    %v1060 = vpop.f32.mrb[0].mxu0
    %v1061 = vadd.f32 0.0, %v1060
    %v1062 = vpop.f32.mrb[0].mxu0
    %1063 = vmatprep.mubr.bf16.mxu0 0
    %1064 = vmatmul.mubr.bf16.gmra.mrb[0].mxu0 %v909
    %v1065 = vpop.f32.mrb[0].mxu0
    %v1066 = vadd.f32 0.0, %v1065
    %v1067 = vpop.f32.mrb[0].mxu0
    %v1068 = vpop.f32.mrb[0].mxu0
    %v1069 = vadd.f32 0.0, %v1068
    %v1070 = vpop.f32.mrb[0].mxu0
    %1071 = vdwg.mxu0
    %v1072 = vmul.f32 %v946, %v602
    %v1073 = vmul.f32 %v949, %v603
    %v1074 = vmul.f32 %v954, %v604
    %v1075 = vmul.f32 %v957, %v605
    %v1076 = vmul.f32 %v962, %v606
    %v1077 = vmul.f32 %v965, %v607
    %v1078 = vmul.f32 %v970, %v608
    %v1079 = vmul.f32 %v973, %v609
    %v1080 = vmul.f32 %v978, %v610
    %v1081 = vmul.f32 %v981, %v611
    %v1082 = vmul.f32 %v986, %v612
    %v1083 = vmul.f32 %v989, %v613
    %v1084 = vmul.f32 %v994, %v614
    %v1085 = vmul.f32 %v997, %v615
    %v1086 = vmul.f32 %v1002, %v616
    %v1087 = vmul.f32 %v1005, %v617
    %v1088 = vmul.f32 %v1010, %v618
    %v1089 = vmul.f32 %v1013, %v619
    %v1090 = vmul.f32 %v1018, %v620
    %v1091 = vmul.f32 %v1021, %v621
    %v1092 = vmul.f32 %v1026, %v622
    %v1093 = vmul.f32 %v1029, %v623
    %v1094 = vmul.f32 %v1034, %v624
    %v1095 = vmul.f32 %v1037, %v625
    %v1096 = vmul.f32 %v1042, %v626
    %v1097 = vmul.f32 %v1045, %v627
    %v1098 = vmul.f32 %v1050, %v628
    %v1099 = vmul.f32 %v1053, %v629
    %v1100 = vmul.f32 %v1058, %v630
    %v1101 = vmul.f32 %v1061, %v631
    %v1102 = vmul.f32 %v1066, %v632
    %v1103 = vmul.f32 %v1069, %v633
    %v1104 = vld [vmem:[%s7] sm:$0xff]
    %v1105 = vld [vmem:[%s7 + $0x8] sm:$0xff]
    %v1106 = vld [vmem:[%s7 + $0x10] sm:$0xff]
    %v1107 = vld [vmem:[%s7 + $0x18] sm:$0xff]
    %v1108 = vpack.c.bf16 %v1073, %v1072
    %v1109 = vpack.c.bf16 %v1075, %v1074
    %v1110 = vpack.c.bf16 %v1077, %v1076
    %v1111 = vpack.c.bf16 %v1079, %v1078
    %v1112 = vpack.c.bf16 %v1081, %v1080
    %v1113 = vpack.c.bf16 %v1083, %v1082
    %v1114 = vpack.c.bf16 %v1085, %v1084
    %v1115 = vpack.c.bf16 %v1087, %v1086
    %v1116 = vpack.c.bf16 %v1089, %v1088
    %v1117 = vpack.c.bf16 %v1091, %v1090
    %v1118 = vpack.c.bf16 %v1093, %v1092
    %v1119 = vpack.c.bf16 %v1095, %v1094
    %v1120 = vpack.c.bf16 %v1097, %v1096
    %v1121 = vpack.c.bf16 %v1099, %v1098
    %v1122 = vpack.c.bf16 %v1101, %v1100
    %v1123 = vpack.c.bf16 %v1103, %v1102
    %v1128 = vunpack.c.l.b16 %v1104
    %v1129 = vunpack.c.h.b16 %v1104
    %v1130 = vunpack.c.l.b16 %v1105
    %v1131 = vunpack.c.h.b16 %v1105
    %v1132 = vunpack.c.l.b16 %v1106
    %v1133 = vunpack.c.h.b16 %v1106
    %v1134 = vunpack.c.l.b16 %v1107
    %v1135 = vunpack.c.h.b16 %v1107
    %v1136 = vpack.c.b16 %v1130, %v1128
    %v1137 = vpack.c.b16 %v1131, %v1129
    %v1138 = vpack.c.b16 %v1134, %v1132
    %v1139 = vpack.c.b16 %v1135, %v1133
    %1144 = vmatprep.subr.bf16.mxu0 0
    %1145 = vmatpush1.bf16.msra.mxu0 %v1108
    %1146 = vmatprep.subr.bf16.mxu0 0
    %1147 = vmatpush1.bf16.msra.mxu0 %v1109
    %1148 = vmatprep.subr.bf16.mxu0 0
    %1149 = vmatpush1.bf16.msra.mxu0 %v1110
    %1150 = vmatprep.subr.bf16.mxu0 0
    %1151 = vmatpush1.bf16.msra.mxu0 %v1111
    %1152 = vmatprep.subr.bf16.mxu0 0
    %1153 = vmatpush1.bf16.msra.mxu0 %v1112
    %1154 = vmatprep.subr.bf16.mxu0 0
    %1155 = vmatpush1.bf16.msra.mxu0 %v1113
    %1156 = vmatprep.subr.bf16.mxu0 0
    %1157 = vmatpush1.bf16.msra.mxu0 %v1114
    %1158 = vmatprep.subr.bf16.mxu0 0
    %1159 = vmatpush1.bf16.msra.mxu0 %v1115
    %1160 = vmatprep.subr.bf16.mxu0 0
    %1161 = vmatpush1.bf16.msra.mxu0 %v1116
    %1162 = vmatprep.subr.bf16.mxu0 0
    %1163 = vmatpush1.bf16.msra.mxu0 %v1117
    %1164 = vmatprep.subr.bf16.mxu0 0
    %1165 = vmatpush1.bf16.msra.mxu0 %v1118
    %1166 = vmatprep.subr.bf16.mxu0 0
    %1167 = vmatpush1.bf16.msra.mxu0 %v1119
    %1168 = vmatprep.subr.bf16.mxu0 0
    %1169 = vmatpush1.bf16.msra.mxu0 %v1120
    %1170 = vmatprep.subr.bf16.mxu0 0
    %1171 = vmatpush1.bf16.msra.mxu0 %v1121
    %1172 = vmatprep.subr.bf16.mxu0 0
    %1173 = vmatpush1.bf16.msra.mxu0 %v1122
    %1174 = vmatprep.subr.bf16.mxu0 0
    %1175 = vmatpush1.bf16.msra.mxu0 %v1123
    %1176 = vmatprep.mubr.bf16.mxu0 %v1137
    %1177 = vmatmul.mubr.bf16.gmra.mrb[0].mxu0 %v1136
    %v1178 = vpop.f32.mrb[0].mxu0
    %v1179 = vadd.f32 0.0, %v1178
    %v1180 = vpop.f32.mrb[0].mxu0
    %v1181 = vpop.f32.mrb[0].mxu0
    %v1182 = vadd.f32 0.0, %v1181
    %v1183 = vpop.f32.mrb[0].mxu0
    %1184 = vmatprep.mubr.bf16.mxu0 %v1139
    %1185 = vmatmul.mubr.bf16.gmra.mrb[0].mxu0 %v1138
    %v1186 = vpop.f32.mrb[0].mxu0
    %v1187 = vadd.f32 0.0, %v1186
    %v1188 = vpop.f32.mrb[0].mxu0
    %v1189 = vpop.f32.mrb[0].mxu0
    %v1190 = vadd.f32 0.0, %v1189
    %v1191 = vpop.f32.mrb[0].mxu0
    %1192 = vdwg.mxu0
    %v1193 = vpack.c.bf16 %v1182, %v1179
    %v1194 = vpack.c.bf16 %v1190, %v1187
    %s1195 = scalar_lea.vmem %s3, 48
    %v1196 = vld [vmem:[%s1195] sm:$0xf]
    %v1197 = vld [vmem:[%s1195 + $0x4] sm:$0xf]
    %v1198 = vld [vmem:[%s1195 + $0x8] sm:$0xf]
    %v1199 = vld [vmem:[%s1195 + $0xc] sm:$0xf]
    %s1200 = scalar_lea.vmem %s4, 3
    %v1201 = vld [vmem:[%s1200] sm:$0x1]
    %v1203 = vlaneseq
    %v1204 = vshrl.u32 %v1203, 7
    %v1205 = vsub.s32 0, %v1204
    %v1206 = vrot.slane %v1201, %v1205
    %v1212 = vunpack.c.l.b16 %v1196
    %v1213 = vunpack.c.l.b16 %v1197
    %v1214 = vunpack.c.l.b16 %v1198
    %v1215 = vunpack.c.l.b16 %v1199
    %v1216 = vpack.c.b16 %v1213, %v1212
    %v1217 = vpack.c.b16 %v1215, %v1214
    %v1221 = vsel %vm71, %v1193, 0
    %v1224 = vsel %vm71, %v1194, 0
    %1226 = vmatprep.subr.bf16.mxu0 0
    %1227 = vmatpush1.bf16.msra.mxu0 %v1216
    %1228 = vmatprep.subr.bf16.mxu0 0
    %1229 = vmatpush1.bf16.msra.mxu0 %v1217
    %1230 = vmatprep.subr.bf16.mxu0 0
    %1231 = vmatpush1.bf16.msra.mxu0 0
    %1232 = vmatprep.subr.bf16.mxu0 0
    %1233 = vmatpush1.bf16.msra.mxu0 0
    %1234 = vmatprep.subr.bf16.mxu0 0
    %1235 = vmatpush1.bf16.msra.mxu0 0
    %1236 = vmatprep.subr.bf16.mxu0 0
    %1237 = vmatpush1.bf16.msra.mxu0 0
    %1238 = vmatprep.subr.bf16.mxu0 0
    %1239 = vmatpush1.bf16.msra.mxu0 0
    %1240 = vmatprep.subr.bf16.mxu0 0
    %1241 = vmatpush1.bf16.msra.mxu0 0
    %1242 = vmatprep.subr.bf16.mxu0 0
    %1243 = vmatpush1.bf16.msra.mxu0 0
    %1244 = vmatprep.subr.bf16.mxu0 0
    %1245 = vmatpush1.bf16.msra.mxu0 0
    %1246 = vmatprep.subr.bf16.mxu0 0
    %1247 = vmatpush1.bf16.msra.mxu0 0
    %1248 = vmatprep.subr.bf16.mxu0 0
    %1249 = vmatpush1.bf16.msra.mxu0 0
    %1250 = vmatprep.subr.bf16.mxu0 0
    %1251 = vmatpush1.bf16.msra.mxu0 0
    %1252 = vmatprep.subr.bf16.mxu0 0
    %1253 = vmatpush1.bf16.msra.mxu0 0
    %1254 = vmatprep.subr.bf16.mxu0 0
    %1255 = vmatpush1.bf16.msra.mxu0 0
    %1256 = vmatprep.subr.bf16.mxu0 0
    %1257 = vmatpush1.bf16.msra.mxu0 0
    %1258 = vmatprep.mubr.bf16.mxu0 0
    %1259 = vmatmul.mubr.bf16.gmra.mrb[0].mxu0 %v1221
    %v1260 = vpop.f32.mrb[0].mxu0
    %v1261 = vadd.f32 %v1206, %v1260
    %v1262 = vpop.f32.mrb[0].mxu0
    %v1263 = vpop.f32.mrb[0].mxu0
    %v1264 = vadd.f32 %v1206, %v1263
    %v1265 = vpop.f32.mrb[0].mxu0
    %1266 = vmatprep.mubr.bf16.mxu0 0
    %1267 = vmatmul.mubr.bf16.gmra.mrb[0].mxu0 %v1224
    %v1268 = vpop.f32.mrb[0].mxu0
    %v1269 = vadd.f32 %v1206, %v1268
    %v1270 = vpop.f32.mrb[0].mxu0
    %v1271 = vpop.f32.mrb[0].mxu0
    %v1272 = vadd.f32 %v1206, %v1271
    %v1273 = vpop.f32.mrb[0].mxu0
    %1274 = vdwg.mxu0
    %1275 = vst.msk [vmem:[#allocation2] sm:$0xff] %vm71, %v1261
    %1276 = vst.msk [vmem:[#allocation2 + $0x8] sm:$0xff] %vm71, %v1264
    %1277 = vst.msk [vmem:[#allocation2 + $0x10] sm:$0xff] %vm71, %v1269
    %1278 = vst.msk [vmem:[#allocation2 + $0x18] sm:$0xff] %vm71, %v1272
    // Predicated region
    $region38: #{tpu_custom_call.1} parent=1 // pred_check
      _
    $region39: #{tpu_custom_call.1} parent=1 // pred_check_branch
      %1280 = sbr.rel (0) target = $region41
    $region40: #{tpu_custom_call.1} parent=1 // pred_region
      %s1282 = ssub.s32 512, 512
      %1283 = vsyncadd [#allocation3], %s1282
      %s1284 = sshll.u32 [#allocation2], 4
      %s1285 = int_to_ptr.vmem [resolvable:$true] %s1284
      %1290 = dma.vmem_to_hbm [thread:$0]  %s1285, 512, %s9, [#allocation3], 128, 128, 8
    $region41: #{tpu_custom_call.1} parent=1 // pred_fallthru
      _
    // Predicated region
    $region42: #{tpu_custom_call.1} parent=1 // pred_check
      _
    $region43: #{tpu_custom_call.1} parent=1 // pred_check_branch
      %1292 = sbr.rel (0) target = $region45
    $region44: #{tpu_custom_call.1} parent=1 // pred_region
      %1293 = dma.done [#allocation3], 512
    $region45: #{tpu_custom_call.1} parent=1 // pred_fallthru
      _
    %1294 = vsyncpa [#allocation3], 1

</llo_original>
